<compile_context>
chip_gen: v5e
topology: v5e:2x2
jax: 0.10.0
libtpu: 0.0.40
codegen_flags: <defaults>
</compile_context>

<pallas_src>
import jax
import jax.numpy as jnp
from jax.experimental import pallas as pl
from jax.experimental.pallas import tpu as pltpu

LANE = 128  # TPU vreg lane width


def _round_up(x, m):
    return (x + m - 1) // m * m


def mlp_kernel(x_ref, w1_ref, b1_ref, w2_ref, b2_ref, w3_ref, b3_ref, o_ref):
    # Fused 3-layer MLP over one (TILE_M, D) batch tile.
    # Weights are VMEM-resident (constant index_map); operands bf16, acc f32 on MXU.
    x = x_ref[...]
    # layer1: Linear + ReLU
    h1 = jnp.dot(x, w1_ref[...], preferred_element_type=jnp.float32)
    h1 = jnp.maximum(h1 + b1_ref[...], 0.0)
    # layer2: Linear + ReLU
    h2 = jnp.dot(h1.astype(w2_ref.dtype), w2_ref[...],
                 preferred_element_type=jnp.float32)
    h2 = jnp.maximum(h2 + b2_ref[...], 0.0)
    # layer3: Linear (no activation on the output layer)
    out = jnp.dot(h2.astype(w3_ref.dtype), w3_ref[...],
                  preferred_element_type=jnp.float32)
    o_ref[...] = (out + b3_ref[...]).astype(o_ref.dtype)


def activation_net_forward(x, params, *, tile_m=256, compute_dtype=jnp.bfloat16):
    """x: [B, in_dim] float32; params: dict of pre-transposed weights + biases."""
    w1, b1, w2, b2, w3, b3 = (params["w1"], params["b1"],
                              params["w2"], params["b2"],
                              params["w3"], params["b3"])
    B, in_dim = x.shape
    h1_dim, h2_dim, out_dim = w1.shape[1], w2.shape[1], w3.shape[1]

    # Pad feature dims to 128 lanes and batch to a multiple of the row tile.
    in_p = _round_up(in_dim, LANE)
    h1_p = _round_up(h1_dim, LANE)
    h2_p = _round_up(h2_dim, LANE)
    out_p = _round_up(out_dim, LANE)
    b_p = _round_up(B, tile_m)

    def pad2(a, rows, cols):
        return jnp.pad(a, ((0, rows - a.shape[0]), (0, cols - a.shape[1])))

    xp = pad2(x, b_p, in_p).astype(compute_dtype)
    w1p = pad2(w1, in_p, h1_p).astype(compute_dtype)
    w2p = pad2(w2, h1_p, h2_p).astype(compute_dtype)
    w3p = pad2(w3, h2_p, out_p).astype(compute_dtype)
    b1p = pad2(b1, 1, h1_p).astype(jnp.float32)
    b2p = pad2(b2, 1, h2_p).astype(jnp.float32)
    b3p = pad2(b3, 1, out_p).astype(jnp.float32)

    grid = (b_p // tile_m,)
    row_tile = lambda n: pl.BlockSpec((tile_m, n), lambda i: (i, 0))      # stream over batch
    resident = lambda shape: pl.BlockSpec(shape, lambda i: (0, 0))        # DMA once, stay in VMEM

    out = pl.pallas_call(
        mlp_kernel,
        out_shape=jax.ShapeDtypeStruct((b_p, out_p), jnp.float32),
        grid=grid,
        in_specs=[
            row_tile(in_p),
            resident(w1p.shape), resident(b1p.shape),
            resident(w2p.shape), resident(b2p.shape),
            resident(w3p.shape), resident(b3p.shape),
        ],
        out_specs=row_tile(out_p),
        compiler_params=pltpu.CompilerParams(
            dimension_semantics=("parallel",),  # shards batch tiles across TCs on v7x
        ),
    )(xp, w1p, b1p, w2p, b2p, w3p, b3p)

    return out[:B, :out_dim]


def init_params(key, in_dim, n_hidden_1, n_hidden_2, out_dim):
    """Deterministic init. Weights stored as [in_features, out_features] (W.T)."""
    ks = jax.random.split(key, 6)

    def linear(kw, kb, fan_in, fan_out):
        # Mimic PyTorch nn.Linear default init: U(-1/sqrt(fan_in), 1/sqrt(fan_in))
        bound = 1.0 / jnp.sqrt(jnp.float32(fan_in))
        w = jax.random.uniform(kw, (fan_in, fan_out), jnp.float32, -bound, bound)
        b = jax.random.uniform(kb, (1, fan_out), jnp.float32, -bound, bound)
        return w, b

    w1, b1 = linear(ks[0], ks[1], in_dim, n_hidden_1)
    w2, b2 = linear(ks[2], ks[3], n_hidden_1, n_hidden_2)
    w3, b3 = linear(ks[4], ks[5], n_hidden_2, out_dim)
    return {"w1": w1, "b1": b1, "w2": w2, "b2": b2, "w3": w3, "b3": b3}


if __name__ == "__main__":
    key = jax.random.PRNGKey(0)
    k_x, k_p = jax.random.split(key)

    # Small shapes consistent with the module's MLP forward.
    batch, in_dim, n_hidden_1, n_hidden_2, out_dim = 8, 32, 64, 64, 16

    x = jax.random.normal(k_x, (batch, in_dim), jnp.float32)
    params = init_params(k_p, in_dim, n_hidden_1, n_hidden_2, out_dim)

    out = activation_net_forward(x, params)
    out = jax.block_until_ready(out)
    assert out.shape == (batch, out_dim)
    assert out.dtype == jnp.float32

    # Pure-JAX reference with the same bf16-operand / f32-accumulation semantics.
    bf = jnp.bfloat16
    h1 = jnp.maximum(
        jnp.dot(x.astype(bf), params["w1"].astype(bf),
                preferred_element_type=jnp.float32) + params["b1"], 0.0)
    h2 = jnp.maximum(
        jnp.dot(h1.astype(bf), params["w2"].astype(bf),
                preferred_element_type=jnp.float32) + params["b2"], 0.0)
    ref = jnp.dot(h2.astype(bf), params["w3"].astype(bf),
                  preferred_element_type=jnp.float32) + params["b3"]
    assert jnp.allclose(out, ref, atol=2e-3, rtol=2e-3)

    # Sanity vs the full-f32 reference (bf16 rounding tolerance).
    h1f = jnp.maximum(x @ params["w1"] + params["b1"], 0.0)
    h2f = jnp.maximum(h1f @ params["w2"] + params["b2"], 0.0)
    reff = h2f @ params["w3"] + params["b3"]
    assert jnp.allclose(out, reff, atol=5e-2, rtol=5e-2)

    print("KERNEL_OK")
</pallas_src>

<mosaic_0001>
module attributes {stable_mosaic.version = 11 : i64} {
  func.func @mlp_kernel(%arg0: i32, %arg1: memref<256x128xbf16, #tpu.memory_space<vmem>>, %arg2: memref<128x128xbf16, #tpu.memory_space<vmem>>, %arg3: memref<1x128xf32, #tpu.memory_space<vmem>>, %arg4: memref<128x128xbf16, #tpu.memory_space<vmem>>, %arg5: memref<1x128xf32, #tpu.memory_space<vmem>>, %arg6: memref<128x128xbf16, #tpu.memory_space<vmem>>, %arg7: memref<1x128xf32, #tpu.memory_space<vmem>>, %arg8: memref<256x128xf32, #tpu.memory_space<vmem>>) attributes {dimension_semantics = [#tpu.dimension_semantics<parallel>], iteration_bounds = array<i64: 1>, scalar_prefetch = 0 : i64, scratch_operands = 0 : i64, tpu.core_type = #tpu.core_type<tc>, window_params = [{transform_indices = @transform_0, window_bounds = array<i64: 256, 128>}, {pipeline_mode = #tpu.pipeline_mode<synchronous>, transform_indices = @transform_1, window_bounds = array<i64: 128, 128>}, {pipeline_mode = #tpu.pipeline_mode<synchronous>, transform_indices = @transform_2, window_bounds = array<i64: 1, 128>}, {pipeline_mode = #tpu.pipeline_mode<synchronous>, transform_indices = @transform_3, window_bounds = array<i64: 128, 128>}, {pipeline_mode = #tpu.pipeline_mode<synchronous>, transform_indices = @transform_4, window_bounds = array<i64: 1, 128>}, {pipeline_mode = #tpu.pipeline_mode<synchronous>, transform_indices = @transform_5, window_bounds = array<i64: 128, 128>}, {pipeline_mode = #tpu.pipeline_mode<synchronous>, transform_indices = @transform_6, window_bounds = array<i64: 1, 128>}, {transform_indices = @transform_7, window_bounds = array<i64: 256, 128>}]} {
    %c0 = arith.constant 0 : index
    %c0_0 = arith.constant 0 : index
    %0 = vector.load %arg1[%c0, %c0_0] : memref<256x128xbf16, #tpu.memory_space<vmem>>, vector<256x128xbf16>
    %c0_1 = arith.constant 0 : index
    %c0_2 = arith.constant 0 : index
    %1 = vector.load %arg2[%c0_1, %c0_2] : memref<128x128xbf16, #tpu.memory_space<vmem>>, vector<128x128xbf16>
    %cst = arith.constant dense<0.000000e+00> : vector<256x128xf32>
    %2 = tpu.matmul %0, %1, %cst {dimension_numbers = #tpu.dot_dimension_numbers<[1], [0], [0], [1], [0, 0, 1, 1], [], []>} : vector<256x128xbf16>, vector<128x128xbf16>, vector<256x128xf32> -> vector<256x128xf32>
    %c0_3 = arith.constant 0 : index
    %c0_4 = arith.constant 0 : index
    %3 = vector.load %arg3[%c0_3, %c0_4] : memref<1x128xf32, #tpu.memory_space<vmem>>, vector<1x128xf32>
    %4 = vector.broadcast %3 : vector<1x128xf32> to vector<256x128xf32>
    %5 = arith.addf %2, %4 : vector<256x128xf32>
    %cst_5 = arith.constant 0.000000e+00 : f32
    %6 = vector.broadcast %cst_5 : f32 to vector<256x128xf32>
    %7 = arith.maximumf %5, %6 : vector<256x128xf32>
    %8 = arith.truncf %7 : vector<256x128xf32> to vector<256x128xbf16>
    %c0_6 = arith.constant 0 : index
    %c0_7 = arith.constant 0 : index
    %9 = vector.load %arg4[%c0_6, %c0_7] : memref<128x128xbf16, #tpu.memory_space<vmem>>, vector<128x128xbf16>
    %cst_8 = arith.constant dense<0.000000e+00> : vector<256x128xf32>
    %10 = tpu.matmul %8, %9, %cst_8 {dimension_numbers = #tpu.dot_dimension_numbers<[1], [0], [0], [1], [0, 0, 1, 1], [], []>} : vector<256x128xbf16>, vector<128x128xbf16>, vector<256x128xf32> -> vector<256x128xf32>
    %c0_9 = arith.constant 0 : index
    %c0_10 = arith.constant 0 : index
    %11 = vector.load %arg5[%c0_9, %c0_10] : memref<1x128xf32, #tpu.memory_space<vmem>>, vector<1x128xf32>
    %12 = vector.broadcast %11 : vector<1x128xf32> to vector<256x128xf32>
    %13 = arith.addf %10, %12 : vector<256x128xf32>
    %cst_11 = arith.constant 0.000000e+00 : f32
    %14 = vector.broadcast %cst_11 : f32 to vector<256x128xf32>
    %15 = arith.maximumf %13, %14 : vector<256x128xf32>
    %16 = arith.truncf %15 : vector<256x128xf32> to vector<256x128xbf16>
    %c0_12 = arith.constant 0 : index
    %c0_13 = arith.constant 0 : index
    %17 = vector.load %arg6[%c0_12, %c0_13] : memref<128x128xbf16, #tpu.memory_space<vmem>>, vector<128x128xbf16>
    %cst_14 = arith.constant dense<0.000000e+00> : vector<256x128xf32>
    %18 = tpu.matmul %16, %17, %cst_14 {dimension_numbers = #tpu.dot_dimension_numbers<[1], [0], [0], [1], [0, 0, 1, 1], [], []>} : vector<256x128xbf16>, vector<128x128xbf16>, vector<256x128xf32> -> vector<256x128xf32>
    %c0_15 = arith.constant 0 : index
    %c0_16 = arith.constant 0 : index
    %19 = vector.load %arg7[%c0_15, %c0_16] : memref<1x128xf32, #tpu.memory_space<vmem>>, vector<1x128xf32>
    %20 = vector.broadcast %19 : vector<1x128xf32> to vector<256x128xf32>
    %21 = arith.addf %18, %20 : vector<256x128xf32>
    %c0_17 = arith.constant 0 : index
    %c0_18 = arith.constant 0 : index
    %22 = vector.load %arg8[%c0_17, %c0_18] : memref<256x128xf32, #tpu.memory_space<vmem>>, vector<256x128xf32>
    tpu.vector_store %arg8[%c0_17, %c0_18], %21 {strides = array<i32>} : memref<256x128xf32, #tpu.memory_space<vmem>>, vector<256x128xf32>,
    return
  }
  func.func @transform_0(%arg0: i32) -> (i32, i32) {
    %c0_i32 = arith.constant 0 : i32
    %c0_i32_0 = arith.constant 0 : i32
    return %arg0, %c0_i32 : i32, i32
  }
  func.func @transform_1(%arg0: i32) -> (i32, i32) {
    %c0_i32 = arith.constant 0 : i32
    %c0_i32_0 = arith.constant 0 : i32
    %c0_i32_1 = arith.constant 0 : i32
    return %c0_i32, %c0_i32_0 : i32, i32
  }
  func.func @transform_2(%arg0: i32) -> (i32, i32) {
    %c0_i32 = arith.constant 0 : i32
    %c0_i32_0 = arith.constant 0 : i32
    %c0_i32_1 = arith.constant 0 : i32
    return %c0_i32, %c0_i32_0 : i32, i32
  }
  func.func @transform_3(%arg0: i32) -> (i32, i32) {
    %c0_i32 = arith.constant 0 : i32
    %c0_i32_0 = arith.constant 0 : i32
    %c0_i32_1 = arith.constant 0 : i32
    return %c0_i32, %c0_i32_0 : i32, i32
  }
  func.func @transform_4(%arg0: i32) -> (i32, i32) {
    %c0_i32 = arith.constant 0 : i32
    %c0_i32_0 = arith.constant 0 : i32
    %c0_i32_1 = arith.constant 0 : i32
    return %c0_i32, %c0_i32_0 : i32, i32
  }
  func.func @transform_5(%arg0: i32) -> (i32, i32) {
    %c0_i32 = arith.constant 0 : i32
    %c0_i32_0 = arith.constant 0 : i32
    %c0_i32_1 = arith.constant 0 : i32
    return %c0_i32, %c0_i32_0 : i32, i32
  }
  func.func @transform_6(%arg0: i32) -> (i32, i32) {
    %c0_i32 = arith.constant 0 : i32
    %c0_i32_0 = arith.constant 0 : i32
    %c0_i32_1 = arith.constant 0 : i32
    return %c0_i32, %c0_i32_0 : i32, i32
  }
  func.func @transform_7(%arg0: i32) -> (i32, i32) {
    %c0_i32 = arith.constant 0 : i32
    %c0_i32_0 = arith.constant 0 : i32
    return %arg0, %c0_i32 : i32, i32
  }
}

</mosaic_0001>

<llo_original>
// kernel: tpu_custom_call.1
$region0: #{tpu_custom_call.1}
  #allocation0 [shape = 'u32[]', space=smem, size = 0x4, offset = 0x4, fixed_abs, tag = 'smem constant byte address 0x4 - core index']
  #allocation1 [shape = 'u32[72,128]{1,0:T(1,128)}', space=vmem, size = 0x9000, scoped, tag = 'internal scratch']
  %s0 = inlined_call_operand.hbm [shape: bf16[256,128], index: 0, kind: input, shape index: {}]
  %s1 = inlined_call_operand.hbm [shape: bf16[128,128], index: 1, kind: input, shape index: {}]
  %s2 = inlined_call_operand.vmem [shape: f32[1,128], index: 2, kind: input, shape index: {}]
  %s3 = inlined_call_operand.hbm [shape: bf16[128,128], index: 3, kind: input, shape index: {}]
  %s4 = inlined_call_operand.vmem [shape: f32[1,128], index: 4, kind: input, shape index: {}]
  %s5 = inlined_call_operand.hbm [shape: bf16[128,128], index: 5, kind: input, shape index: {}]
  %s6 = inlined_call_operand.vmem [shape: f32[1,128], index: 6, kind: input, shape index: {}]
  %s7 = inlined_call_operand.hbm [shape: f32[256,128], index: 7, kind: output, shape index: {}]
  %s8 = sld [smem:[#allocation0]]
  $region54: #{tpu_custom_call.1} parent=0
    _
  %s10 = ssub.s32 1, %s8
  %s11 = scalar_select 0, %s10, %s8
  $region1: #{tpu_custom_call.1} parent=0
    #allocation2 [shape = 'u8[65536]{0}', space=vmem, size = 0x10000, scoped, tag = 'input window, operand 0, single buffered']
    #allocation3 [shape = 's32[1]{0}', space=sflag, size = 0x4, scoped, tag = 'scoped memory for tpu_custom_call.1']
    #allocation4 [shape = 's32[1]{0}', space=sflag, size = 0x4, scoped, tag = 'scoped memory for tpu_custom_call.1']
    #allocation5 [shape = 'u8[32768]{0}', space=vmem, size = 0x8000, scoped, tag = 'input window, operand 1, single buffered']
    #allocation6 [shape = 's32[1]{0}', space=sflag, size = 0x4, scoped, tag = 'scoped memory for tpu_custom_call.1']
    #allocation7 [shape = 'u8[32768]{0}', space=vmem, size = 0x8000, scoped, tag = 'input window, operand 3, single buffered']
    #allocation8 [shape = 'u8[32768]{0}', space=vmem, size = 0x8000, scoped, tag = 'input window, operand 5, single buffered']
    #allocation9 [shape = 's32[1]{0}', space=sflag, size = 0x4, scoped, tag = 'scoped memory for tpu_custom_call.1']
    #allocation10 [shape = 'u8[131072]{0}', space=vmem, size = 0x20000, scoped, tag = 'output window, operand 0, single buffered']
    %12 = vsyncpa [#allocation3], 0
    %13 = vsyncpa [#allocation6], 0
    %14 = vsyncpa [#allocation9], 0
    %15 = vsyncpa [#allocation4], 0
    // Predicated region
    $region2: #{tpu_custom_call.1} parent=1 // pred_check
      _
    $region3: #{tpu_custom_call.1} parent=1 // pred_check_branch
      %17 = sbr.rel (0) target = $region5
    $region4: #{tpu_custom_call.1} parent=1 // pred_region
      %19 = vsyncadd [#allocation3], 0
      %s20 = sshll.u32 %s0, 4
      %s21 = int_to_ptr.hbm [resolvable:$true] %s20
      %s22 = sshll.u32 [#allocation2], 4
      %s23 = int_to_ptr.vmem [resolvable:$true] %s22
      %28 = dma.hbm_to_vmem [thread:$0]  %s21, 2048, %s23, [#allocation3], 64, 64, 4
    $region5: #{tpu_custom_call.1} parent=1 // pred_fallthru
      _
    // Predicated region
    $region6: #{tpu_custom_call.1} parent=1 // pred_check
      _
    $region7: #{tpu_custom_call.1} parent=1 // pred_check_branch
      %30 = sbr.rel (0) target = $region9
    $region8: #{tpu_custom_call.1} parent=1 // pred_region
      %32 = vsyncadd [#allocation6], 0
      %s33 = sshll.u32 %s1, 4
      %s34 = int_to_ptr.hbm [resolvable:$true] %s33
      %s35 = sshll.u32 [#allocation5], 4
      %s36 = int_to_ptr.vmem [resolvable:$true] %s35
      %41 = dma.hbm_to_vmem [thread:$0]  %s34, 1024, %s36, [#allocation6], 64, 64, 4
    $region9: #{tpu_custom_call.1} parent=1 // pred_fallthru
      _
    // Predicated region
    $region10: #{tpu_custom_call.1} parent=1 // pred_check
      _
    $region11: #{tpu_custom_call.1} parent=1 // pred_check_branch
      %43 = sbr.rel (0) target = $region13
    $region12: #{tpu_custom_call.1} parent=1 // pred_region
      _
    $region13: #{tpu_custom_call.1} parent=1 // pred_fallthru
      _
    // Predicated region
    $region14: #{tpu_custom_call.1} parent=1 // pred_check
      _
    $region15: #{tpu_custom_call.1} parent=1 // pred_check_branch
      %45 = sbr.rel (0) target = $region17
    $region16: #{tpu_custom_call.1} parent=1 // pred_region
      %47 = vsyncadd [#allocation6], 0
      %s48 = sshll.u32 %s3, 4
      %s49 = int_to_ptr.hbm [resolvable:$true] %s48
      %s50 = sshll.u32 [#allocation7], 4
      %s51 = int_to_ptr.vmem [resolvable:$true] %s50
      %56 = dma.hbm_to_vmem [thread:$0]  %s49, 1024, %s51, [#allocation6], 64, 64, 4
    $region17: #{tpu_custom_call.1} parent=1 // pred_fallthru
      _
    // Predicated region
    $region18: #{tpu_custom_call.1} parent=1 // pred_check
      _
    $region19: #{tpu_custom_call.1} parent=1 // pred_check_branch
      %58 = sbr.rel (0) target = $region21
    $region20: #{tpu_custom_call.1} parent=1 // pred_region
      _
    $region21: #{tpu_custom_call.1} parent=1 // pred_fallthru
      _
    // Predicated region
    $region22: #{tpu_custom_call.1} parent=1 // pred_check
      _
    $region23: #{tpu_custom_call.1} parent=1 // pred_check_branch
      %60 = sbr.rel (0) target = $region25
    $region24: #{tpu_custom_call.1} parent=1 // pred_region
      %62 = vsyncadd [#allocation9], 0
      %s63 = sshll.u32 %s5, 4
      %s64 = int_to_ptr.hbm [resolvable:$true] %s63
      %s65 = sshll.u32 [#allocation8], 4
      %s66 = int_to_ptr.vmem [resolvable:$true] %s65
      %71 = dma.hbm_to_vmem [thread:$0]  %s64, 1024, %s66, [#allocation9], 64, 64, 4
    $region25: #{tpu_custom_call.1} parent=1 // pred_fallthru
      _
    // Predicated region
    $region26: #{tpu_custom_call.1} parent=1 // pred_check
      _
    $region27: #{tpu_custom_call.1} parent=1 // pred_check_branch
      %73 = sbr.rel (0) target = $region29
    $region28: #{tpu_custom_call.1} parent=1 // pred_region
      _
    $region29: #{tpu_custom_call.1} parent=1 // pred_fallthru
      _
    // Predicated region
    $region30: #{tpu_custom_call.1} parent=1 // pred_check
      _
    $region31: #{tpu_custom_call.1} parent=1 // pred_check_branch
      %75 = sbr.rel (0) target = $region33
    $region32: #{tpu_custom_call.1} parent=1 // pred_region
      %77 = dma.done [#allocation3], 2048
    $region33: #{tpu_custom_call.1} parent=1 // pred_fallthru
      _
    // Predicated region
    $region34: #{tpu_custom_call.1} parent=1 // pred_check
      _
    $region35: #{tpu_custom_call.1} parent=1 // pred_check_branch
      %79 = sbr.rel (0) target = $region37
    $region36: #{tpu_custom_call.1} parent=1 // pred_region
      %81 = dma.done [#allocation6], 1024
    $region37: #{tpu_custom_call.1} parent=1 // pred_fallthru
      _
    // Predicated region
    $region38: #{tpu_custom_call.1} parent=1 // pred_check
      _
    $region39: #{tpu_custom_call.1} parent=1 // pred_check_branch
      %83 = sbr.rel (0) target = $region41
    $region40: #{tpu_custom_call.1} parent=1 // pred_region
      %85 = dma.done [#allocation6], 1024
    $region41: #{tpu_custom_call.1} parent=1 // pred_fallthru
      _
    // Predicated region
    $region42: #{tpu_custom_call.1} parent=1 // pred_check
      _
    $region43: #{tpu_custom_call.1} parent=1 // pred_check_branch
      %87 = sbr.rel (0) target = $region45
    $region44: #{tpu_custom_call.1} parent=1 // pred_region
      %89 = dma.done [#allocation9], 1024
    $region45: #{tpu_custom_call.1} parent=1 // pred_fallthru
      _
    %v90 = vld [vmem:[#allocation2] sm:$0xf]
    %v91 = vld [vmem:[#allocation2 + $0x4] sm:$0xf]
    %v92 = vld [vmem:[#allocation2 + $0x8] sm:$0xf]
    %v93 = vld [vmem:[#allocation2 + $0xc] sm:$0xf]
    %v94 = vld [vmem:[#allocation2 + $0x10] sm:$0xf]
    %v95 = vld [vmem:[#allocation2 + $0x14] sm:$0xf]
    %v96 = vld [vmem:[#allocation2 + $0x18] sm:$0xf]
    %v97 = vld [vmem:[#allocation2 + $0x1c] sm:$0xf]
    %v98 = vld [vmem:[#allocation2 + $0x20] sm:$0xf]
    %v99 = vld [vmem:[#allocation2 + $0x24] sm:$0xf]
    %v100 = vld [vmem:[#allocation2 + $0x28] sm:$0xf]
    %v101 = vld [vmem:[#allocation2 + $0x2c] sm:$0xf]
    %v102 = vld [vmem:[#allocation2 + $0x30] sm:$0xf]
    %v103 = vld [vmem:[#allocation2 + $0x34] sm:$0xf]
    %v104 = vld [vmem:[#allocation2 + $0x38] sm:$0xf]
    %v105 = vld [vmem:[#allocation2 + $0x3c] sm:$0xf]
    %v106 = vld [vmem:[#allocation2 + $0x40] sm:$0xf]
    %v107 = vld [vmem:[#allocation2 + $0x44] sm:$0xf]
    %v108 = vld [vmem:[#allocation2 + $0x48] sm:$0xf]
    %v109 = vld [vmem:[#allocation2 + $0x4c] sm:$0xf]
    %v110 = vld [vmem:[#allocation2 + $0x50] sm:$0xf]
    %v111 = vld [vmem:[#allocation2 + $0x54] sm:$0xf]
    %v112 = vld [vmem:[#allocation2 + $0x58] sm:$0xf]
    %v113 = vld [vmem:[#allocation2 + $0x5c] sm:$0xf]
    %v114 = vld [vmem:[#allocation2 + $0x60] sm:$0xf]
    %v115 = vld [vmem:[#allocation2 + $0x64] sm:$0xf]
    %v116 = vld [vmem:[#allocation2 + $0x68] sm:$0xf]
    %v117 = vld [vmem:[#allocation2 + $0x6c] sm:$0xf]
    %v118 = vld [vmem:[#allocation2 + $0x70] sm:$0xf]
    %v119 = vld [vmem:[#allocation2 + $0x74] sm:$0xf]
    %v120 = vld [vmem:[#allocation2 + $0x78] sm:$0xf]
    %v121 = vld [vmem:[#allocation2 + $0x7c] sm:$0xf]
    %v122 = vld [vmem:[#allocation5] sm:$0xf]
    %v123 = vld [vmem:[#allocation5 + $0x4] sm:$0xf]
    %v124 = vld [vmem:[#allocation5 + $0x8] sm:$0xf]
    %v125 = vld [vmem:[#allocation5 + $0xc] sm:$0xf]
    %v126 = vld [vmem:[#allocation5 + $0x10] sm:$0xf]
    %v127 = vld [vmem:[#allocation5 + $0x14] sm:$0xf]
    %v128 = vld [vmem:[#allocation5 + $0x18] sm:$0xf]
    %v129 = vld [vmem:[#allocation5 + $0x1c] sm:$0xf]
    %v130 = vld [vmem:[#allocation5 + $0x20] sm:$0xf]
    %v131 = vld [vmem:[#allocation5 + $0x24] sm:$0xf]
    %v132 = vld [vmem:[#allocation5 + $0x28] sm:$0xf]
    %v133 = vld [vmem:[#allocation5 + $0x2c] sm:$0xf]
    %v134 = vld [vmem:[#allocation5 + $0x30] sm:$0xf]
    %v135 = vld [vmem:[#allocation5 + $0x34] sm:$0xf]
    %v136 = vld [vmem:[#allocation5 + $0x38] sm:$0xf]
    %v137 = vld [vmem:[#allocation5 + $0x3c] sm:$0xf]
    %v138 = vld [vmem:[%s2] sm:$0x1]
    %v140 = vperm.slane %v138, 0
    %v174 = vunpack.c.l.b16 %v90
    %v175 = vunpack.c.l.b16 %v91
    %v176 = vunpack.c.l.b16 %v92
    %v177 = vunpack.c.l.b16 %v93
    %v178 = vunpack.c.l.b16 %v94
    %v179 = vunpack.c.l.b16 %v95
    %v180 = vunpack.c.l.b16 %v96
    %v181 = vunpack.c.l.b16 %v97
    %v182 = vunpack.c.l.b16 %v98
    %v183 = vunpack.c.l.b16 %v99
    %v184 = vunpack.c.l.b16 %v100
    %v185 = vunpack.c.l.b16 %v101
    %v186 = vunpack.c.l.b16 %v102
    %v187 = vunpack.c.l.b16 %v103
    %v188 = vunpack.c.l.b16 %v104
    %v189 = vunpack.c.l.b16 %v105
    %v190 = vunpack.c.l.b16 %v106
    %v191 = vunpack.c.l.b16 %v107
    %v192 = vunpack.c.l.b16 %v108
    %v193 = vunpack.c.l.b16 %v109
    %v194 = vunpack.c.l.b16 %v110
    %v195 = vunpack.c.l.b16 %v111
    %v196 = vunpack.c.l.b16 %v112
    %v197 = vunpack.c.l.b16 %v113
    %v198 = vunpack.c.l.b16 %v114
    %v199 = vunpack.c.l.b16 %v115
    %v200 = vunpack.c.l.b16 %v116
    %v201 = vunpack.c.l.b16 %v117
    %v202 = vunpack.c.l.b16 %v118
    %v203 = vunpack.c.l.b16 %v119
    %v204 = vunpack.c.l.b16 %v120
    %v205 = vunpack.c.l.b16 %v121
    %v206 = vpack.c.b16 %v175, %v174
    %v207 = vpack.c.b16 %v177, %v176
    %v208 = vpack.c.b16 %v179, %v178
    %v209 = vpack.c.b16 %v181, %v180
    %v210 = vpack.c.b16 %v183, %v182
    %v211 = vpack.c.b16 %v185, %v184
    %v212 = vpack.c.b16 %v187, %v186
    %v213 = vpack.c.b16 %v189, %v188
    %v214 = vpack.c.b16 %v191, %v190
    %v215 = vpack.c.b16 %v193, %v192
    %v216 = vpack.c.b16 %v195, %v194
    %v217 = vpack.c.b16 %v197, %v196
    %v218 = vpack.c.b16 %v199, %v198
    %v219 = vpack.c.b16 %v201, %v200
    %v220 = vpack.c.b16 %v203, %v202
    %v221 = vpack.c.b16 %v205, %v204
    %v254 = vunpack.c.l.b16 %v122
    %v255 = vunpack.c.l.b16 %v123
    %v256 = vunpack.c.l.b16 %v124
    %v257 = vunpack.c.l.b16 %v125
    %v258 = vunpack.c.l.b16 %v126
    %v259 = vunpack.c.l.b16 %v127
    %v260 = vunpack.c.l.b16 %v128
    %v261 = vunpack.c.l.b16 %v129
    %v262 = vunpack.c.l.b16 %v130
    %v263 = vunpack.c.l.b16 %v131
    %v264 = vunpack.c.l.b16 %v132
    %v265 = vunpack.c.l.b16 %v133
    %v266 = vunpack.c.l.b16 %v134
    %v267 = vunpack.c.l.b16 %v135
    %v268 = vunpack.c.l.b16 %v136
    %v269 = vunpack.c.l.b16 %v137
    %v270 = vpack.c.b16 %v255, %v254
    %v271 = vpack.c.b16 %v257, %v256
    %v272 = vpack.c.b16 %v259, %v258
    %v273 = vpack.c.b16 %v261, %v260
    %v274 = vpack.c.b16 %v263, %v262
    %v275 = vpack.c.b16 %v265, %v264
    %v276 = vpack.c.b16 %v267, %v266
    %v277 = vpack.c.b16 %v269, %v268
    %286 = vmatpush.bf16.msra.mxu0 %v277
    %287 = vmatpush.bf16.msra.mxu0 %v276
    %288 = vmatpush.bf16.msra.mxu0 %v275
    %289 = vmatpush.bf16.msra.mxu0 %v274
    %290 = vmatpush.bf16.msra.mxu0 %v273
    %291 = vmatpush.bf16.msra.mxu0 %v272
    %292 = vmatpush.bf16.msra.mxu0 %v271
    %293 = vmatpush.bf16.msra.mxu0 %v270
    %294 = vmatmul.bf16.gmra.mxu0 %v206
    %v295 = vpop.f32.mrf.mxu0
    %v296 = vadd.f32 %v140, %v295
    %v297 = vpop.f32.mrf.mxu0
    %v298 = vadd.f32 %v140, %v297
    %299 = vmatmul.bf16.gmra.mxu0 %v207
    %v300 = vpop.f32.mrf.mxu0
    %v301 = vadd.f32 %v140, %v300
    %v302 = vpop.f32.mrf.mxu0
    %v303 = vadd.f32 %v140, %v302
    %304 = vmatmul.bf16.gmra.mxu0 %v208
    %v305 = vpop.f32.mrf.mxu0
    %v306 = vadd.f32 %v140, %v305
    %v307 = vpop.f32.mrf.mxu0
    %v308 = vadd.f32 %v140, %v307
    %309 = vmatmul.bf16.gmra.mxu0 %v209
    %v310 = vpop.f32.mrf.mxu0
    %v311 = vadd.f32 %v140, %v310
    %v312 = vpop.f32.mrf.mxu0
    %v313 = vadd.f32 %v140, %v312
    %314 = vmatmul.bf16.gmra.mxu0 %v210
    %v315 = vpop.f32.mrf.mxu0
    %v316 = vadd.f32 %v140, %v315
    %v317 = vpop.f32.mrf.mxu0
    %v318 = vadd.f32 %v140, %v317
    %319 = vmatmul.bf16.gmra.mxu0 %v211
    %v320 = vpop.f32.mrf.mxu0
    %v321 = vadd.f32 %v140, %v320
    %v322 = vpop.f32.mrf.mxu0
    %v323 = vadd.f32 %v140, %v322
    %324 = vmatmul.bf16.gmra.mxu0 %v212
    %v325 = vpop.f32.mrf.mxu0
    %v326 = vadd.f32 %v140, %v325
    %v327 = vpop.f32.mrf.mxu0
    %v328 = vadd.f32 %v140, %v327
    %329 = vmatmul.bf16.gmra.mxu0 %v213
    %v330 = vpop.f32.mrf.mxu0
    %v331 = vadd.f32 %v140, %v330
    %v332 = vpop.f32.mrf.mxu0
    %v333 = vadd.f32 %v140, %v332
    %334 = vmatmul.bf16.gmra.mxu0 %v214
    %v335 = vpop.f32.mrf.mxu0
    %v336 = vadd.f32 %v140, %v335
    %v337 = vpop.f32.mrf.mxu0
    %v338 = vadd.f32 %v140, %v337
    %339 = vmatmul.bf16.gmra.mxu0 %v215
    %v340 = vpop.f32.mrf.mxu0
    %v341 = vadd.f32 %v140, %v340
    %v342 = vpop.f32.mrf.mxu0
    %v343 = vadd.f32 %v140, %v342
    %344 = vmatmul.bf16.gmra.mxu0 %v216
    %v345 = vpop.f32.mrf.mxu0
    %v346 = vadd.f32 %v140, %v345
    %v347 = vpop.f32.mrf.mxu0
    %v348 = vadd.f32 %v140, %v347
    %349 = vmatmul.bf16.gmra.mxu0 %v217
    %v350 = vpop.f32.mrf.mxu0
    %v351 = vadd.f32 %v140, %v350
    %v352 = vpop.f32.mrf.mxu0
    %v353 = vadd.f32 %v140, %v352
    %354 = vmatmul.bf16.gmra.mxu0 %v218
    %v355 = vpop.f32.mrf.mxu0
    %v356 = vadd.f32 %v140, %v355
    %v357 = vpop.f32.mrf.mxu0
    %v358 = vadd.f32 %v140, %v357
    %359 = vmatmul.bf16.gmra.mxu0 %v219
    %v360 = vpop.f32.mrf.mxu0
    %v361 = vadd.f32 %v140, %v360
    %v362 = vpop.f32.mrf.mxu0
    %v363 = vadd.f32 %v140, %v362
    %364 = vmatmul.bf16.gmra.mxu0 %v220
    %v365 = vpop.f32.mrf.mxu0
    %v366 = vadd.f32 %v140, %v365
    %v367 = vpop.f32.mrf.mxu0
    %v368 = vadd.f32 %v140, %v367
    %369 = vmatmul.bf16.gmra.mxu0 %v221
    %v370 = vpop.f32.mrf.mxu0
    %v371 = vadd.f32 %v140, %v370
    %v372 = vpop.f32.mrf.mxu0
    %v373 = vadd.f32 %v140, %v372
    %374 = vdwg.mxu0
    %v375 = vmax.f32 %v296, 0.0
    %v376 = vmax.f32 %v298, 0.0
    %v377 = vmax.f32 %v301, 0.0
    %v378 = vmax.f32 %v303, 0.0
    %v379 = vmax.f32 %v306, 0.0
    %v380 = vmax.f32 %v308, 0.0
    %v381 = vmax.f32 %v311, 0.0
    %v382 = vmax.f32 %v313, 0.0
    %v383 = vmax.f32 %v316, 0.0
    %v384 = vmax.f32 %v318, 0.0
    %v385 = vmax.f32 %v321, 0.0
    %v386 = vmax.f32 %v323, 0.0
    %v387 = vmax.f32 %v326, 0.0
    %v388 = vmax.f32 %v328, 0.0
    %v389 = vmax.f32 %v331, 0.0
    %v390 = vmax.f32 %v333, 0.0
    %v391 = vmax.f32 %v336, 0.0
    %v392 = vmax.f32 %v338, 0.0
    %v393 = vmax.f32 %v341, 0.0
    %v394 = vmax.f32 %v343, 0.0
    %v395 = vmax.f32 %v346, 0.0
    %v396 = vmax.f32 %v348, 0.0
    %v397 = vmax.f32 %v351, 0.0
    %v398 = vmax.f32 %v353, 0.0
    %v399 = vmax.f32 %v356, 0.0
    %v400 = vmax.f32 %v358, 0.0
    %v401 = vmax.f32 %v361, 0.0
    %v402 = vmax.f32 %v363, 0.0
    %v403 = vmax.f32 %v366, 0.0
    %v404 = vmax.f32 %v368, 0.0
    %v405 = vmax.f32 %v371, 0.0
    %v406 = vmax.f32 %v373, 0.0
    %v407 = vpack.c.bf16 %v376, %v375
    %v408 = vpack.c.bf16 %v378, %v377
    %v409 = vpack.c.bf16 %v380, %v379
    %v410 = vpack.c.bf16 %v382, %v381
    %v411 = vpack.c.bf16 %v384, %v383
    %v412 = vpack.c.bf16 %v386, %v385
    %v413 = vpack.c.bf16 %v388, %v387
    %v414 = vpack.c.bf16 %v390, %v389
    %v415 = vpack.c.bf16 %v392, %v391
    %v416 = vpack.c.bf16 %v394, %v393
    %v417 = vpack.c.bf16 %v396, %v395
    %v418 = vpack.c.bf16 %v398, %v397
    %v419 = vpack.c.bf16 %v400, %v399
    %v420 = vpack.c.bf16 %v402, %v401
    %v421 = vpack.c.bf16 %v404, %v403
    %v422 = vpack.c.bf16 %v406, %v405
    %v423 = vld [vmem:[#allocation7] sm:$0xf]
    %v424 = vld [vmem:[#allocation7 + $0x4] sm:$0xf]
    %v425 = vld [vmem:[#allocation7 + $0x8] sm:$0xf]
    %v426 = vld [vmem:[#allocation7 + $0xc] sm:$0xf]
    %v427 = vld [vmem:[#allocation7 + $0x10] sm:$0xf]
    %v428 = vld [vmem:[#allocation7 + $0x14] sm:$0xf]
    %v429 = vld [vmem:[#allocation7 + $0x18] sm:$0xf]
    %v430 = vld [vmem:[#allocation7 + $0x1c] sm:$0xf]
    %v431 = vld [vmem:[#allocation7 + $0x20] sm:$0xf]
    %v432 = vld [vmem:[#allocation7 + $0x24] sm:$0xf]
    %v433 = vld [vmem:[#allocation7 + $0x28] sm:$0xf]
    %v434 = vld [vmem:[#allocation7 + $0x2c] sm:$0xf]
    %v435 = vld [vmem:[#allocation7 + $0x30] sm:$0xf]
    %v436 = vld [vmem:[#allocation7 + $0x34] sm:$0xf]
    %v437 = vld [vmem:[#allocation7 + $0x38] sm:$0xf]
    %v438 = vld [vmem:[#allocation7 + $0x3c] sm:$0xf]
    %v439 = vld [vmem:[%s4] sm:$0x1]
    %v441 = vperm.slane %v439, 0
    %v459 = vunpack.c.l.b16 %v423
    %v460 = vunpack.c.l.b16 %v424
    %v461 = vunpack.c.l.b16 %v425
    %v462 = vunpack.c.l.b16 %v426
    %v463 = vunpack.c.l.b16 %v427
    %v464 = vunpack.c.l.b16 %v428
    %v465 = vunpack.c.l.b16 %v429
    %v466 = vunpack.c.l.b16 %v430
    %v467 = vunpack.c.l.b16 %v431
    %v468 = vunpack.c.l.b16 %v432
    %v469 = vunpack.c.l.b16 %v433
    %v470 = vunpack.c.l.b16 %v434
    %v471 = vunpack.c.l.b16 %v435
    %v472 = vunpack.c.l.b16 %v436
    %v473 = vunpack.c.l.b16 %v437
    %v474 = vunpack.c.l.b16 %v438
    %v475 = vpack.c.b16 %v460, %v459
    %v476 = vpack.c.b16 %v462, %v461
    %v477 = vpack.c.b16 %v464, %v463
    %v478 = vpack.c.b16 %v466, %v465
    %v479 = vpack.c.b16 %v468, %v467
    %v480 = vpack.c.b16 %v470, %v469
    %v481 = vpack.c.b16 %v472, %v471
    %v482 = vpack.c.b16 %v474, %v473
    %491 = vmatpush.bf16.msra.mxu0 %v482
    %492 = vmatpush.bf16.msra.mxu0 %v481
    %493 = vmatpush.bf16.msra.mxu0 %v480
    %494 = vmatpush.bf16.msra.mxu0 %v479
    %495 = vmatpush.bf16.msra.mxu0 %v478
    %496 = vmatpush.bf16.msra.mxu0 %v477
    %497 = vmatpush.bf16.msra.mxu0 %v476
    %498 = vmatpush.bf16.msra.mxu0 %v475
    %499 = vmatmul.bf16.gmra.mxu0 %v407
    %v500 = vpop.f32.mrf.mxu0
    %v501 = vadd.f32 %v441, %v500
    %v502 = vpop.f32.mrf.mxu0
    %v503 = vadd.f32 %v441, %v502
    %504 = vmatmul.bf16.gmra.mxu0 %v408
    %v505 = vpop.f32.mrf.mxu0
    %v506 = vadd.f32 %v441, %v505
    %v507 = vpop.f32.mrf.mxu0
    %v508 = vadd.f32 %v441, %v507
    %509 = vmatmul.bf16.gmra.mxu0 %v409
    %v510 = vpop.f32.mrf.mxu0
    %v511 = vadd.f32 %v441, %v510
    %v512 = vpop.f32.mrf.mxu0
    %v513 = vadd.f32 %v441, %v512
    %514 = vmatmul.bf16.gmra.mxu0 %v410
    %v515 = vpop.f32.mrf.mxu0
    %v516 = vadd.f32 %v441, %v515
    %v517 = vpop.f32.mrf.mxu0
    %v518 = vadd.f32 %v441, %v517
    %519 = vmatmul.bf16.gmra.mxu0 %v411
    %v520 = vpop.f32.mrf.mxu0
    %v521 = vadd.f32 %v441, %v520
    %v522 = vpop.f32.mrf.mxu0
    %v523 = vadd.f32 %v441, %v522
    %524 = vmatmul.bf16.gmra.mxu0 %v412
    %v525 = vpop.f32.mrf.mxu0
    %v526 = vadd.f32 %v441, %v525
    %v527 = vpop.f32.mrf.mxu0
    %v528 = vadd.f32 %v441, %v527
    %529 = vmatmul.bf16.gmra.mxu0 %v413
    %v530 = vpop.f32.mrf.mxu0
    %v531 = vadd.f32 %v441, %v530
    %v532 = vpop.f32.mrf.mxu0
    %v533 = vadd.f32 %v441, %v532
    %534 = vmatmul.bf16.gmra.mxu0 %v414
    %v535 = vpop.f32.mrf.mxu0
    %v536 = vadd.f32 %v441, %v535
    %v537 = vpop.f32.mrf.mxu0
    %v538 = vadd.f32 %v441, %v537
    %539 = vmatmul.bf16.gmra.mxu0 %v415
    %v540 = vpop.f32.mrf.mxu0
    %v541 = vadd.f32 %v441, %v540
    %v542 = vpop.f32.mrf.mxu0
    %v543 = vadd.f32 %v441, %v542
    %544 = vmatmul.bf16.gmra.mxu0 %v416
    %v545 = vpop.f32.mrf.mxu0
    %v546 = vadd.f32 %v441, %v545
    %v547 = vpop.f32.mrf.mxu0
    %v548 = vadd.f32 %v441, %v547
    %549 = vmatmul.bf16.gmra.mxu0 %v417
    %v550 = vpop.f32.mrf.mxu0
    %v551 = vadd.f32 %v441, %v550
    %v552 = vpop.f32.mrf.mxu0
    %v553 = vadd.f32 %v441, %v552
    %554 = vmatmul.bf16.gmra.mxu0 %v418
    %v555 = vpop.f32.mrf.mxu0
    %v556 = vadd.f32 %v441, %v555
    %v557 = vpop.f32.mrf.mxu0
    %v558 = vadd.f32 %v441, %v557
    %559 = vmatmul.bf16.gmra.mxu0 %v419
    %v560 = vpop.f32.mrf.mxu0
    %v561 = vadd.f32 %v441, %v560
    %v562 = vpop.f32.mrf.mxu0
    %v563 = vadd.f32 %v441, %v562
    %564 = vmatmul.bf16.gmra.mxu0 %v420
    %v565 = vpop.f32.mrf.mxu0
    %v566 = vadd.f32 %v441, %v565
    %v567 = vpop.f32.mrf.mxu0
    %v568 = vadd.f32 %v441, %v567
    %569 = vmatmul.bf16.gmra.mxu0 %v421
    %v570 = vpop.f32.mrf.mxu0
    %v571 = vadd.f32 %v441, %v570
    %v572 = vpop.f32.mrf.mxu0
    %v573 = vadd.f32 %v441, %v572
    %574 = vmatmul.bf16.gmra.mxu0 %v422
    %v575 = vpop.f32.mrf.mxu0
    %v576 = vadd.f32 %v441, %v575
    %v577 = vpop.f32.mrf.mxu0
    %v578 = vadd.f32 %v441, %v577
    %579 = vdwg.mxu0
    %v580 = vmax.f32 %v501, 0.0
    %v581 = vmax.f32 %v503, 0.0
    %v582 = vmax.f32 %v506, 0.0
    %v583 = vmax.f32 %v508, 0.0
    %v584 = vmax.f32 %v511, 0.0
    %v585 = vmax.f32 %v513, 0.0
    %v586 = vmax.f32 %v516, 0.0
    %v587 = vmax.f32 %v518, 0.0
    %v588 = vmax.f32 %v521, 0.0
    %v589 = vmax.f32 %v523, 0.0
    %v590 = vmax.f32 %v526, 0.0
    %v591 = vmax.f32 %v528, 0.0
    %v592 = vmax.f32 %v531, 0.0
    %v593 = vmax.f32 %v533, 0.0
    %v594 = vmax.f32 %v536, 0.0
    %v595 = vmax.f32 %v538, 0.0
    %v596 = vmax.f32 %v541, 0.0
    %v597 = vmax.f32 %v543, 0.0
    %v598 = vmax.f32 %v546, 0.0
    %v599 = vmax.f32 %v548, 0.0
    %v600 = vmax.f32 %v551, 0.0
    %v601 = vmax.f32 %v553, 0.0
    %v602 = vmax.f32 %v556, 0.0
    %v603 = vmax.f32 %v558, 0.0
    %v604 = vmax.f32 %v561, 0.0
    %v605 = vmax.f32 %v563, 0.0
    %v606 = vmax.f32 %v566, 0.0
    %v607 = vmax.f32 %v568, 0.0
    %v608 = vmax.f32 %v571, 0.0
    %v609 = vmax.f32 %v573, 0.0
    %v610 = vmax.f32 %v576, 0.0
    %v611 = vmax.f32 %v578, 0.0
    %v612 = vpack.c.bf16 %v581, %v580
    %v613 = vpack.c.bf16 %v583, %v582
    %v614 = vpack.c.bf16 %v585, %v584
    %v615 = vpack.c.bf16 %v587, %v586
    %v616 = vpack.c.bf16 %v589, %v588
    %v617 = vpack.c.bf16 %v591, %v590
    %v618 = vpack.c.bf16 %v593, %v592
    %v619 = vpack.c.bf16 %v595, %v594
    %v620 = vpack.c.bf16 %v597, %v596
    %v621 = vpack.c.bf16 %v599, %v598
    %v622 = vpack.c.bf16 %v601, %v600
    %v623 = vpack.c.bf16 %v603, %v602
    %v624 = vpack.c.bf16 %v605, %v604
    %v625 = vpack.c.bf16 %v607, %v606
    %v626 = vpack.c.bf16 %v609, %v608
    %v627 = vpack.c.bf16 %v611, %v610
    %v628 = vld [vmem:[#allocation8] sm:$0xf]
    %v629 = vld [vmem:[#allocation8 + $0x4] sm:$0xf]
    %v630 = vld [vmem:[#allocation8 + $0x8] sm:$0xf]
    %v631 = vld [vmem:[#allocation8 + $0xc] sm:$0xf]
    %v632 = vld [vmem:[#allocation8 + $0x10] sm:$0xf]
    %v633 = vld [vmem:[#allocation8 + $0x14] sm:$0xf]
    %v634 = vld [vmem:[#allocation8 + $0x18] sm:$0xf]
    %v635 = vld [vmem:[#allocation8 + $0x1c] sm:$0xf]
    %v636 = vld [vmem:[#allocation8 + $0x20] sm:$0xf]
    %v637 = vld [vmem:[#allocation8 + $0x24] sm:$0xf]
    %v638 = vld [vmem:[#allocation8 + $0x28] sm:$0xf]
    %v639 = vld [vmem:[#allocation8 + $0x2c] sm:$0xf]
    %v640 = vld [vmem:[#allocation8 + $0x30] sm:$0xf]
    %v641 = vld [vmem:[#allocation8 + $0x34] sm:$0xf]
    %v642 = vld [vmem:[#allocation8 + $0x38] sm:$0xf]
    %v643 = vld [vmem:[#allocation8 + $0x3c] sm:$0xf]
    %v644 = vld [vmem:[%s6] sm:$0x1]
    %v646 = vperm.slane %v644, 0
    %v664 = vunpack.c.l.b16 %v628
    %v665 = vunpack.c.l.b16 %v629
    %v666 = vunpack.c.l.b16 %v630
    %v667 = vunpack.c.l.b16 %v631
    %v668 = vunpack.c.l.b16 %v632
    %v669 = vunpack.c.l.b16 %v633
    %v670 = vunpack.c.l.b16 %v634
    %v671 = vunpack.c.l.b16 %v635
    %v672 = vunpack.c.l.b16 %v636
    %v673 = vunpack.c.l.b16 %v637
    %v674 = vunpack.c.l.b16 %v638
    %v675 = vunpack.c.l.b16 %v639
    %v676 = vunpack.c.l.b16 %v640
    %v677 = vunpack.c.l.b16 %v641
    %v678 = vunpack.c.l.b16 %v642
    %v679 = vunpack.c.l.b16 %v643
    %v680 = vpack.c.b16 %v665, %v664
    %v681 = vpack.c.b16 %v667, %v666
    %v682 = vpack.c.b16 %v669, %v668
    %v683 = vpack.c.b16 %v671, %v670
    %v684 = vpack.c.b16 %v673, %v672
    %v685 = vpack.c.b16 %v675, %v674
    %v686 = vpack.c.b16 %v677, %v676
    %v687 = vpack.c.b16 %v679, %v678
    %696 = vmatpush.bf16.msra.mxu0 %v687
    %697 = vmatpush.bf16.msra.mxu0 %v686
    %698 = vmatpush.bf16.msra.mxu0 %v685
    %699 = vmatpush.bf16.msra.mxu0 %v684
    %700 = vmatpush.bf16.msra.mxu0 %v683
    %701 = vmatpush.bf16.msra.mxu0 %v682
    %702 = vmatpush.bf16.msra.mxu0 %v681
    %703 = vmatpush.bf16.msra.mxu0 %v680
    %704 = vmatmul.bf16.gmra.mxu0 %v612
    %v705 = vpop.f32.mrf.mxu0
    %v706 = vadd.f32 %v646, %v705
    %v707 = vpop.f32.mrf.mxu0
    %v708 = vadd.f32 %v646, %v707
    %709 = vmatmul.bf16.gmra.mxu0 %v613
    %v710 = vpop.f32.mrf.mxu0
    %v711 = vadd.f32 %v646, %v710
    %v712 = vpop.f32.mrf.mxu0
    %v713 = vadd.f32 %v646, %v712
    %714 = vmatmul.bf16.gmra.mxu0 %v614
    %v715 = vpop.f32.mrf.mxu0
    %v716 = vadd.f32 %v646, %v715
    %v717 = vpop.f32.mrf.mxu0
    %v718 = vadd.f32 %v646, %v717
    %719 = vmatmul.bf16.gmra.mxu0 %v615
    %v720 = vpop.f32.mrf.mxu0
    %v721 = vadd.f32 %v646, %v720
    %v722 = vpop.f32.mrf.mxu0
    %v723 = vadd.f32 %v646, %v722
    %724 = vmatmul.bf16.gmra.mxu0 %v616
    %v725 = vpop.f32.mrf.mxu0
    %v726 = vadd.f32 %v646, %v725
    %v727 = vpop.f32.mrf.mxu0
    %v728 = vadd.f32 %v646, %v727
    %729 = vmatmul.bf16.gmra.mxu0 %v617
    %v730 = vpop.f32.mrf.mxu0
    %v731 = vadd.f32 %v646, %v730
    %v732 = vpop.f32.mrf.mxu0
    %v733 = vadd.f32 %v646, %v732
    %734 = vmatmul.bf16.gmra.mxu0 %v618
    %v735 = vpop.f32.mrf.mxu0
    %v736 = vadd.f32 %v646, %v735
    %v737 = vpop.f32.mrf.mxu0
    %v738 = vadd.f32 %v646, %v737
    %739 = vmatmul.bf16.gmra.mxu0 %v619
    %v740 = vpop.f32.mrf.mxu0
    %v741 = vadd.f32 %v646, %v740
    %v742 = vpop.f32.mrf.mxu0
    %v743 = vadd.f32 %v646, %v742
    %744 = vmatmul.bf16.gmra.mxu0 %v620
    %v745 = vpop.f32.mrf.mxu0
    %v746 = vadd.f32 %v646, %v745
    %v747 = vpop.f32.mrf.mxu0
    %v748 = vadd.f32 %v646, %v747
    %749 = vmatmul.bf16.gmra.mxu0 %v621
    %v750 = vpop.f32.mrf.mxu0
    %v751 = vadd.f32 %v646, %v750
    %v752 = vpop.f32.mrf.mxu0
    %v753 = vadd.f32 %v646, %v752
    %754 = vmatmul.bf16.gmra.mxu0 %v622
    %v755 = vpop.f32.mrf.mxu0
    %v756 = vadd.f32 %v646, %v755
    %v757 = vpop.f32.mrf.mxu0
    %v758 = vadd.f32 %v646, %v757
    %759 = vmatmul.bf16.gmra.mxu0 %v623
    %v760 = vpop.f32.mrf.mxu0
    %v761 = vadd.f32 %v646, %v760
    %v762 = vpop.f32.mrf.mxu0
    %v763 = vadd.f32 %v646, %v762
    %764 = vmatmul.bf16.gmra.mxu0 %v624
    %v765 = vpop.f32.mrf.mxu0
    %v766 = vadd.f32 %v646, %v765
    %v767 = vpop.f32.mrf.mxu0
    %v768 = vadd.f32 %v646, %v767
    %769 = vmatmul.bf16.gmra.mxu0 %v625
    %v770 = vpop.f32.mrf.mxu0
    %v771 = vadd.f32 %v646, %v770
    %v772 = vpop.f32.mrf.mxu0
    %v773 = vadd.f32 %v646, %v772
    %774 = vmatmul.bf16.gmra.mxu0 %v626
    %v775 = vpop.f32.mrf.mxu0
    %v776 = vadd.f32 %v646, %v775
    %v777 = vpop.f32.mrf.mxu0
    %v778 = vadd.f32 %v646, %v777
    %779 = vmatmul.bf16.gmra.mxu0 %v627
    %v780 = vpop.f32.mrf.mxu0
    %v781 = vadd.f32 %v646, %v780
    %v782 = vpop.f32.mrf.mxu0
    %v783 = vadd.f32 %v646, %v782
    %784 = vdwg.mxu0
    %785 = vst [vmem:[#allocation10] sm:$0xff] %v706
    %786 = vst [vmem:[#allocation10 + $0x8] sm:$0xff] %v708
    %787 = vst [vmem:[#allocation10 + $0x10] sm:$0xff] %v711
    %788 = vst [vmem:[#allocation10 + $0x18] sm:$0xff] %v713
    %789 = vst [vmem:[#allocation10 + $0x20] sm:$0xff] %v716
    %790 = vst [vmem:[#allocation10 + $0x28] sm:$0xff] %v718
    %791 = vst [vmem:[#allocation10 + $0x30] sm:$0xff] %v721
    %792 = vst [vmem:[#allocation10 + $0x38] sm:$0xff] %v723
    %793 = vst [vmem:[#allocation10 + $0x40] sm:$0xff] %v726
    %794 = vst [vmem:[#allocation10 + $0x48] sm:$0xff] %v728
    %795 = vst [vmem:[#allocation10 + $0x50] sm:$0xff] %v731
    %796 = vst [vmem:[#allocation10 + $0x58] sm:$0xff] %v733
    %797 = vst [vmem:[#allocation10 + $0x60] sm:$0xff] %v736
    %798 = vst [vmem:[#allocation10 + $0x68] sm:$0xff] %v738
    %799 = vst [vmem:[#allocation10 + $0x70] sm:$0xff] %v741
    %800 = vst [vmem:[#allocation10 + $0x78] sm:$0xff] %v743
    %801 = vst [vmem:[#allocation10 + $0x80] sm:$0xff] %v746
    %802 = vst [vmem:[#allocation10 + $0x88] sm:$0xff] %v748
    %803 = vst [vmem:[#allocation10 + $0x90] sm:$0xff] %v751
    %804 = vst [vmem:[#allocation10 + $0x98] sm:$0xff] %v753
    %805 = vst [vmem:[#allocation10 + $0xa0] sm:$0xff] %v756
    %806 = vst [vmem:[#allocation10 + $0xa8] sm:$0xff] %v758
    %807 = vst [vmem:[#allocation10 + $0xb0] sm:$0xff] %v761
    %808 = vst [vmem:[#allocation10 + $0xb8] sm:$0xff] %v763
    %809 = vst [vmem:[#allocation10 + $0xc0] sm:$0xff] %v766
    %810 = vst [vmem:[#allocation10 + $0xc8] sm:$0xff] %v768
    %811 = vst [vmem:[#allocation10 + $0xd0] sm:$0xff] %v771
    %812 = vst [vmem:[#allocation10 + $0xd8] sm:$0xff] %v773
    %813 = vst [vmem:[#allocation10 + $0xe0] sm:$0xff] %v776
    %814 = vst [vmem:[#allocation10 + $0xe8] sm:$0xff] %v778
    %815 = vst [vmem:[#allocation10 + $0xf0] sm:$0xff] %v781
    %816 = vst [vmem:[#allocation10 + $0xf8] sm:$0xff] %v783
    // Predicated region
    $region46: #{tpu_custom_call.1} parent=1 // pred_check
      _
    $region47: #{tpu_custom_call.1} parent=1 // pred_check_branch
      %818 = sbr.rel (0) target = $region49
    $region48: #{tpu_custom_call.1} parent=1 // pred_region
      %820 = vsyncadd [#allocation4], 0
      %s821 = sshll.u32 [#allocation10], 4
      %s822 = int_to_ptr.vmem [resolvable:$true] %s821
      %s823 = sshll.u32 %s7, 4
      %s824 = int_to_ptr.hbm [resolvable:$true] %s823
      %829 = dma.vmem_to_hbm [thread:$0]  %s822, 4096, %s824, [#allocation4], 128, 128, 8
    $region49: #{tpu_custom_call.1} parent=1 // pred_fallthru
      _
    // Predicated region
    $region50: #{tpu_custom_call.1} parent=1 // pred_check
      _
    $region51: #{tpu_custom_call.1} parent=1 // pred_check_branch
      %831 = sbr.rel (0) target = $region53
    $region52: #{tpu_custom_call.1} parent=1 // pred_region
      %833 = dma.done [#allocation4], 4096
    $region53: #{tpu_custom_call.1} parent=1 // pred_fallthru
      _
    %834 = vsyncpa [#allocation3], 1
    %835 = vsyncpa [#allocation6], 1
    %836 = vsyncpa [#allocation9], 1
    %837 = vsyncpa [#allocation4], 1

</llo_original>
